<compile_context>
chip_gen: v7x
topology: tpu7x:2x2x1
jax: 0.10.0
libtpu: 0.0.40
codegen_flags: <defaults>
</compile_context>

<pallas_src>
import functools

import jax
import jax.numpy as jnp
import numpy as np
from jax.experimental import pallas as pl
from jax.experimental.pallas import tpu as pltpu

LOG_STD_MAX = 2.0
LOG_STD_MIN = -20.0
_LOG_2PI = float(np.log(2.0 * np.pi))
_LOG_2 = float(np.log(2.0))

# CORE_PARALLEL exists on recent jax; probed once, with fallback to "parallel".
_CORE_PARALLEL = getattr(pltpu, "CORE_PARALLEL", None)
_CORE_PARALLEL_OK = None  # None = unknown, True/False after first multi-tile call


def _softplus(x):
    # numerically stable softplus: max(x, 0) + log1p(exp(-|x|))
    return jnp.maximum(x, 0.0) + jnp.log1p(jnp.exp(-jnp.abs(x)))


def _round_up(x, m):
    return ((x + m - 1) // m) * m


def actor_kernel(*refs, deterministic: bool, with_logprob: bool, action_dim: int):
    """One batch tile (batch on the 128-lane axis) of the Actor forward pass.

    ref order: x, [eps], w1, b1, w2, b2, w_head, b_head, out
      x    : (state_dim, bt)
      eps  : (action_dim, bt)                  (only when stochastic)
      w*   : (out_features, in_features),  b*: (out_features, 1)
      out  : (action_dim + 1, bt) = [a ; logp]  if with_logprob
             (action_dim, bt)     = a           otherwise
    """
    idx = 0
    x_ref = refs[idx]; idx += 1
    if not deterministic:
        eps_ref = refs[idx]; idx += 1
    w1_ref, b1_ref, w2_ref, b2_ref, wh_ref, bh_ref = refs[idx:idx + 6]; idx += 6
    out_ref = refs[idx]

    x = x_ref[...]

    # --- a_net: (Linear + ReLU) x 2, output activation is ReLU ---
    h1 = jnp.dot(w1_ref[...], x, preferred_element_type=jnp.float32) + b1_ref[...]
    h1 = jnp.maximum(h1, 0.0)
    h2 = jnp.dot(w2_ref[...], h1, preferred_element_type=jnp.float32) + b2_ref[...]
    net_out = jnp.maximum(h2, 0.0)

    # --- fused heads: one matmul producing [mu ; log_std] on sublanes ---
    head = jnp.dot(wh_ref[...], net_out, preferred_element_type=jnp.float32) + bh_ref[...]
    mu = head[:action_dim, :]
    log_std = jnp.clip(head[action_dim:, :], LOG_STD_MIN, LOG_STD_MAX)

    # --- reparameterized sample: u = mu + std * eps ---
    if deterministic:
        u = mu
    else:
        eps = eps_ref[...]
        u = mu + jnp.exp(log_std) * eps

    # --- enforce action bounds ---
    a = jnp.tanh(u)

    if with_logprob:
        # Normal(mu, std).log_prob(u): z = (u - mu)/std == eps exactly
        # (and == 0 in deterministic mode), so no divide is needed.
        if deterministic:
            normal_lp = -log_std - 0.5 * _LOG_2PI
        else:
            normal_lp = -0.5 * eps * eps - log_std - 0.5 * _LOG_2PI
        tanh_corr = 2.0 * (_LOG_2 - u - _softplus(-2.0 * u))
        logp = jnp.sum(normal_lp - tanh_corr, axis=0, keepdims=True)   # (1, bt)
        out_ref[:action_dim, :] = a
        out_ref[action_dim:, :] = logp
    else:
        out_ref[...] = a


def actor_forward(state, params, eps=None, *, deterministic=False,
                  with_logprob=True, block_b=2048):
    """Run the Actor forward pass in a Pallas TPU kernel.

    state : (B, state_dim) float32
    params: dict from init_params (weights (out, in), biases (out, 1),
            mu/log_std heads pre-fused into whead/bhead)
    eps   : (B, action_dim) standard-normal noise (required iff stochastic)

    Returns (a, logp) with a: (B, action_dim), logp: (B, 1) or None.
    """
    state = jnp.asarray(state, jnp.float32)
    B, state_dim = state.shape
    action_dim = params["whead"].shape[0] // 2

    # Batch lives on the 128-lane axis inside the kernel.  These transposes are
    # tiny (feature dims are small); in a full SAC pipeline the caller can keep
    # the (features, batch) layout end-to-end and skip them entirely.
    args = [state.T]                                           # (state_dim, B)
    if not deterministic:
        if eps is None:
            raise ValueError("eps is required when deterministic=False")
        args.append(jnp.asarray(eps, jnp.float32).T)           # (action_dim, B)

    # --- batch tiling: lane tiles are multiples of 128, no wrapper-side pad;
    #     ragged last tiles are handled by Pallas boundary-block masking. ---
    block_b = max(128, (int(block_b) // 128) * 128)
    if B < 256:
        bt = B                           # single block (block dim == array dim)
    else:
        # >= 2 tiles so a 2-TensorCore chip (v7x) can split the batch.
        bt = min(block_b, _round_up(pl.cdiv(B, 2), 128))
    grid = (pl.cdiv(B, bt),)

    def batch_spec(n_rows):
        return pl.BlockSpec((n_rows, bt), lambda i: (0, i))

    def resident_spec(arr):
        # same block every grid step -> weights stay resident in VMEM
        return pl.BlockSpec(arr.shape, lambda i: (0, 0))

    in_specs = [batch_spec(state_dim)]
    if not deterministic:
        in_specs.append(batch_spec(action_dim))
    for name in ("w1", "b1", "w2", "b2", "whead", "bhead"):
        in_specs.append(resident_spec(params[name]))
        args.append(params[name])

    out_rows = action_dim + 1 if with_logprob else action_dim
    out_shape = jax.ShapeDtypeStruct((out_rows, B), jnp.float32)
    out_spec = batch_spec(out_rows)

    kernel = functools.partial(
        actor_kernel,
        deterministic=deterministic,
        with_logprob=with_logprob,
        action_dim=action_dim,
    )

    def run(dim_sem):
        return pl.pallas_call(
            kernel,
            out_shape=out_shape,
            grid=grid,
            in_specs=in_specs,
            out_specs=out_spec,
            compiler_params=pltpu.CompilerParams(
                dimension_semantics=(dim_sem,)),
        )(*args)

    global _CORE_PARALLEL_OK
    if grid[0] > 1 and _CORE_PARALLEL is not None and _CORE_PARALLEL_OK is not False:
        if _CORE_PARALLEL_OK is None:
            try:
                out = jax.block_until_ready(run(_CORE_PARALLEL))
                _CORE_PARALLEL_OK = True
            except Exception:
                _CORE_PARALLEL_OK = False
                out = run("parallel")
        else:
            out = run(_CORE_PARALLEL)
    else:
        out = run("parallel" if grid[0] > 1 else "arbitrary")

    if with_logprob:
        return out[:action_dim, :].T, out[action_dim:, :].T
    return out.T, None


def init_params(key, state_dim, action_dim, hid_shape):
    """Parameter init (uniform fan-in, torch.nn.Linear-style), kernel layout.

    Weights are (out_features, in_features); biases (out_features, 1).
    The mu / log_std heads are fused here, once, so the hot path never
    concatenates.
    """
    layers = [state_dim] + list(hid_shape)
    ks = jax.random.split(key, 8)

    def lin(kw, kb, fan_in, fan_out):
        bound = 1.0 / np.sqrt(fan_in)
        w = jax.random.uniform(kw, (fan_out, fan_in), jnp.float32, -bound, bound)
        b = jax.random.uniform(kb, (fan_out, 1), jnp.float32, -bound, bound)
        return w, b

    w1, b1 = lin(ks[0], ks[1], layers[0], layers[1])
    w2, b2 = lin(ks[2], ks[3], layers[1], layers[2])
    wmu, bmu = lin(ks[4], ks[5], layers[2], action_dim)
    wls, bls = lin(ks[6], ks[7], layers[2], action_dim)
    return {
        "w1": w1, "b1": b1, "w2": w2, "b2": b2,
        "whead": jnp.concatenate([wmu, wls], axis=0),
        "bhead": jnp.concatenate([bmu, bls], axis=0),
    }


def actor_forward_ref(state, params, eps, *, deterministic=False):
    """Pure-JAX reference for correctness checking."""
    action_dim = params["whead"].shape[0] // 2
    x = jnp.asarray(state, jnp.float32).T
    h1 = jnp.maximum(params["w1"] @ x + params["b1"], 0.0)
    net_out = jnp.maximum(params["w2"] @ h1 + params["b2"], 0.0)
    head = params["whead"] @ net_out + params["bhead"]
    mu = head[:action_dim]
    log_std = jnp.clip(head[action_dim:], LOG_STD_MIN, LOG_STD_MAX)
    std = jnp.exp(log_std)
    u = mu if deterministic else mu + std * jnp.asarray(eps, jnp.float32).T
    a = jnp.tanh(u)
    z = (u - mu) / std
    normal_lp = -0.5 * z * z - log_std - 0.5 * _LOG_2PI
    tanh_corr = 2.0 * (_LOG_2 - u - jax.nn.softplus(-2.0 * u))
    logp = jnp.sum(normal_lp - tanh_corr, axis=0, keepdims=True)
    return a.T, logp.T


if __name__ == "__main__":
    state_dim = 8
    action_dim = 4
    hid_shape = (32, 32)

    key = jax.random.PRNGKey(0)
    k_param, k_state, k_eps, k_state2, k_eps2 = jax.random.split(key, 5)

    params = init_params(k_param, state_dim, action_dim, hid_shape)

    # --- small batch: single-block path ---
    batch = 4
    state = jax.random.normal(k_state, (batch, state_dim), jnp.float32)
    eps = jax.random.normal(k_eps, (batch, action_dim), jnp.float32)

    # stochastic + logprob
    a, logp = actor_forward(state, params, eps, deterministic=False, with_logprob=True)
    a = jax.block_until_ready(a)
    logp = jax.block_until_ready(logp)
    a_ref, logp_ref = actor_forward_ref(state, params, eps, deterministic=False)
    np.testing.assert_allclose(np.asarray(a), np.asarray(a_ref), rtol=1e-5, atol=1e-5)
    np.testing.assert_allclose(np.asarray(logp), np.asarray(logp_ref), rtol=1e-4, atol=1e-4)

    # deterministic + logprob (no eps input / DMA)
    a_d, logp_d = actor_forward(state, params, deterministic=True, with_logprob=True)
    a_d = jax.block_until_ready(a_d)
    a_dref, logp_dref = actor_forward_ref(state, params, eps, deterministic=True)
    np.testing.assert_allclose(np.asarray(a_d), np.asarray(a_dref), rtol=1e-5, atol=1e-5)
    np.testing.assert_allclose(np.asarray(logp_d), np.asarray(logp_dref), rtol=1e-4, atol=1e-4)

    # stochastic, no logprob (logp path compiled out, single narrow output)
    a_nl, logp_nl = actor_forward(state, params, eps, deterministic=False, with_logprob=False)
    a_nl = jax.block_until_ready(a_nl)
    assert logp_nl is None
    np.testing.assert_allclose(np.asarray(a_nl), np.asarray(a_ref), rtol=1e-5, atol=1e-5)

    # --- larger batch: >= 2 lane tiles, ragged last tile, no wrapper pad ---
    batch2 = 300
    state2 = jax.random.normal(k_state2, (batch2, state_dim), jnp.float32)
    eps2 = jax.random.normal(k_eps2, (batch2, action_dim), jnp.float32)
    a2, logp2 = actor_forward(state2, params, eps2, deterministic=False, with_logprob=True)
    a2 = jax.block_until_ready(a2)
    logp2 = jax.block_until_ready(logp2)
    a2_ref, logp2_ref = actor_forward_ref(state2, params, eps2, deterministic=False)
    np.testing.assert_allclose(np.asarray(a2), np.asarray(a2_ref), rtol=1e-5, atol=1e-5)
    np.testing.assert_allclose(np.asarray(logp2), np.asarray(logp2_ref), rtol=1e-4, atol=1e-4)

    print("KERNEL_OK")
</pallas_src>

<mosaic_0001>
module attributes {stable_mosaic.version = 11 : i64} {
  func.func @actor_kernel(%arg0: i32, %arg1: memref<8x4xf32, #tpu.memory_space<vmem>>, %arg2: memref<4x4xf32, #tpu.memory_space<vmem>>, %arg3: memref<32x8xf32, #tpu.memory_space<vmem>>, %arg4: memref<32x1xf32, #tpu.memory_space<vmem>>, %arg5: memref<32x32xf32, #tpu.memory_space<vmem>>, %arg6: memref<32x1xf32, #tpu.memory_space<vmem>>, %arg7: memref<8x32xf32, #tpu.memory_space<vmem>>, %arg8: memref<8x1xf32, #tpu.memory_space<vmem>>, %arg9: memref<5x4xf32, #tpu.memory_space<vmem>>) attributes {dimension_semantics = [#tpu.dimension_semantics<arbitrary>], iteration_bounds = array<i64: 1>, scalar_prefetch = 0 : i64, scratch_operands = 0 : i64, tpu.core_type = #tpu.core_type<tc>, window_params = [{transform_indices = @transform_0, window_bounds = array<i64: 8, 4>}, {transform_indices = @transform_1, window_bounds = array<i64: 4, 4>}, {pipeline_mode = #tpu.pipeline_mode<synchronous>, transform_indices = @transform_2, window_bounds = array<i64: 32, 8>}, {pipeline_mode = #tpu.pipeline_mode<synchronous>, transform_indices = @transform_3, window_bounds = array<i64: 32, 1>}, {pipeline_mode = #tpu.pipeline_mode<synchronous>, transform_indices = @transform_4, window_bounds = array<i64: 32, 32>}, {pipeline_mode = #tpu.pipeline_mode<synchronous>, transform_indices = @transform_5, window_bounds = array<i64: 32, 1>}, {pipeline_mode = #tpu.pipeline_mode<synchronous>, transform_indices = @transform_6, window_bounds = array<i64: 8, 32>}, {pipeline_mode = #tpu.pipeline_mode<synchronous>, transform_indices = @transform_7, window_bounds = array<i64: 8, 1>}, {transform_indices = @transform_8, window_bounds = array<i64: 5, 4>}]} {
    %c0 = arith.constant 0 : index
    %c0_0 = arith.constant 0 : index
    %0 = vector.load %arg1[%c0, %c0_0] : memref<8x4xf32, #tpu.memory_space<vmem>>, vector<8x4xf32>
    %c0_1 = arith.constant 0 : index
    %c0_2 = arith.constant 0 : index
    %1 = vector.load %arg3[%c0_1, %c0_2] : memref<32x8xf32, #tpu.memory_space<vmem>>, vector<32x8xf32>
    %cst = arith.constant dense<0.000000e+00> : vector<32x4xf32>
    %2 = tpu.matmul %1, %0, %cst {dimension_numbers = #tpu.dot_dimension_numbers<[1], [0], [0], [1], [0, 0, 1, 1], [], []>} : vector<32x8xf32>, vector<8x4xf32>, vector<32x4xf32> -> vector<32x4xf32>
    %c0_3 = arith.constant 0 : index
    %c0_4 = arith.constant 0 : index
    %3 = vector.load %arg4[%c0_3, %c0_4] : memref<32x1xf32, #tpu.memory_space<vmem>>, vector<32x1xf32>
    %4 = vector.broadcast %3 : vector<32x1xf32> to vector<32x4xf32>
    %5 = arith.addf %2, %4 : vector<32x4xf32>
    %cst_5 = arith.constant 0.000000e+00 : f32
    %6 = vector.broadcast %cst_5 : f32 to vector<32x4xf32>
    %7 = arith.maximumf %5, %6 : vector<32x4xf32>
    %c0_6 = arith.constant 0 : index
    %c0_7 = arith.constant 0 : index
    %8 = vector.load %arg5[%c0_6, %c0_7] : memref<32x32xf32, #tpu.memory_space<vmem>>, vector<32x32xf32>
    %cst_8 = arith.constant dense<0.000000e+00> : vector<32x4xf32>
    %9 = tpu.matmul %8, %7, %cst_8 {dimension_numbers = #tpu.dot_dimension_numbers<[1], [0], [0], [1], [0, 0, 1, 1], [], []>} : vector<32x32xf32>, vector<32x4xf32>, vector<32x4xf32> -> vector<32x4xf32>
    %c0_9 = arith.constant 0 : index
    %c0_10 = arith.constant 0 : index
    %10 = vector.load %arg6[%c0_9, %c0_10] : memref<32x1xf32, #tpu.memory_space<vmem>>, vector<32x1xf32>
    %11 = vector.broadcast %10 : vector<32x1xf32> to vector<32x4xf32>
    %12 = arith.addf %9, %11 : vector<32x4xf32>
    %cst_11 = arith.constant 0.000000e+00 : f32
    %13 = vector.broadcast %cst_11 : f32 to vector<32x4xf32>
    %14 = arith.maximumf %12, %13 : vector<32x4xf32>
    %c0_12 = arith.constant 0 : index
    %c0_13 = arith.constant 0 : index
    %15 = vector.load %arg7[%c0_12, %c0_13] : memref<8x32xf32, #tpu.memory_space<vmem>>, vector<8x32xf32>
    %cst_14 = arith.constant dense<0.000000e+00> : vector<8x4xf32>
    %16 = tpu.matmul %15, %14, %cst_14 {dimension_numbers = #tpu.dot_dimension_numbers<[1], [0], [0], [1], [0, 0, 1, 1], [], []>} : vector<8x32xf32>, vector<32x4xf32>, vector<8x4xf32> -> vector<8x4xf32>
    %c0_15 = arith.constant 0 : index
    %c0_16 = arith.constant 0 : index
    %17 = vector.load %arg8[%c0_15, %c0_16] : memref<8x1xf32, #tpu.memory_space<vmem>>, vector<8x1xf32>
    %18 = vector.broadcast %17 : vector<8x1xf32> to vector<8x4xf32>
    %19 = arith.addf %16, %18 : vector<8x4xf32>
    %20 = vector.extract_strided_slice %19 {offsets = [0, 0], sizes = [4, 4], strides = [1, 1]} : vector<8x4xf32> to vector<4x4xf32>
    %21 = vector.extract_strided_slice %19 {offsets = [4, 0], sizes = [4, 4], strides = [1, 1]} : vector<8x4xf32> to vector<4x4xf32>
    %cst_17 = arith.constant -2.000000e+01 : f32
    %cst_18 = arith.constant 2.000000e+00 : f32
    %22 = vector.broadcast %cst_17 : f32 to vector<4x4xf32>
    %23 = arith.maximumf %22, %21 : vector<4x4xf32>
    %24 = vector.broadcast %cst_18 : f32 to vector<4x4xf32>
    %25 = arith.minimumf %24, %23 : vector<4x4xf32>
    %c0_19 = arith.constant 0 : index
    %c0_20 = arith.constant 0 : index
    %26 = vector.load %arg2[%c0_19, %c0_20] : memref<4x4xf32, #tpu.memory_space<vmem>>, vector<4x4xf32>
    %27 = math.exp %25 : vector<4x4xf32>
    %28 = arith.mulf %27, %26 : vector<4x4xf32>
    %29 = arith.addf %20, %28 : vector<4x4xf32>
    %30 = math.tanh %29 : vector<4x4xf32>
    %cst_21 = arith.constant -5.000000e-01 : f32
    %31 = vector.broadcast %cst_21 : f32 to vector<4x4xf32>
    %32 = arith.mulf %31, %26 : vector<4x4xf32>
    %33 = arith.mulf %32, %26 : vector<4x4xf32>
    %34 = arith.subf %33, %25 : vector<4x4xf32>
    %cst_22 = arith.constant 0.918938517 : f32
    %35 = vector.broadcast %cst_22 : f32 to vector<4x4xf32>
    %36 = arith.subf %34, %35 : vector<4x4xf32>
    %cst_23 = arith.constant 0.693147182 : f32
    %37 = vector.broadcast %cst_23 : f32 to vector<4x4xf32>
    %38 = arith.subf %37, %29 : vector<4x4xf32>
    %cst_24 = arith.constant -2.000000e+00 : f32
    %39 = vector.broadcast %cst_24 : f32 to vector<4x4xf32>
    %40 = arith.mulf %39, %29 : vector<4x4xf32>
    %cst_25 = arith.constant 0.000000e+00 : f32
    %41 = vector.broadcast %cst_25 : f32 to vector<4x4xf32>
    %42 = arith.maximumf %40, %41 : vector<4x4xf32>
    %43 = math.absf %40 : vector<4x4xf32>
    %cst_26 = arith.constant 0.000000e+00 : f32
    %44 = vector.broadcast %cst_26 : f32 to vector<4x4xf32>
    %45 = arith.subf %44, %43 : vector<4x4xf32>
    %46 = math.exp %45 : vector<4x4xf32>
    %47 = math.log1p %46 : vector<4x4xf32>
    %48 = arith.addf %42, %47 : vector<4x4xf32>
    %49 = arith.subf %38, %48 : vector<4x4xf32>
    %cst_27 = arith.constant 2.000000e+00 : f32
    %50 = vector.broadcast %cst_27 : f32 to vector<4x4xf32>
    %51 = arith.mulf %50, %49 : vector<4x4xf32>
    %52 = arith.subf %36, %51 : vector<4x4xf32>
    %cst_28 = arith.constant dense<0.000000e+00> : vector<4xf32>
    %53 = vector.multi_reduction <add>, %52, %cst_28 [0] : vector<4x4xf32> to vector<4xf32>
    %54 = vector.shape_cast %53 : vector<4xf32> to vector<1x4xf32>
    %c0_29 = arith.constant 0 : index
    %c0_30 = arith.constant 0 : index
    %55 = vector.load %arg9[%c0_29, %c0_30] : memref<5x4xf32, #tpu.memory_space<vmem>>, vector<4x4xf32>
    tpu.vector_store %arg9[%c0_29, %c0_30], %30 {strides = array<i32>} : memref<5x4xf32, #tpu.memory_space<vmem>>, vector<4x4xf32>,
    %c4 = arith.constant 4 : index
    %c0_31 = arith.constant 0 : index
    %56 = vector.load %arg9[%c4, %c0_31] : memref<5x4xf32, #tpu.memory_space<vmem>>, vector<1x4xf32>
    tpu.vector_store %arg9[%c4, %c0_31], %54 {strides = array<i32>} : memref<5x4xf32, #tpu.memory_space<vmem>>, vector<1x4xf32>,
    return
  }
  func.func @transform_0(%arg0: i32) -> (i32, i32) {
    %c0_i32 = arith.constant 0 : i32
    %c0_i32_0 = arith.constant 0 : i32
    return %c0_i32, %arg0 : i32, i32
  }
  func.func @transform_1(%arg0: i32) -> (i32, i32) {
    %c0_i32 = arith.constant 0 : i32
    %c0_i32_0 = arith.constant 0 : i32
    return %c0_i32, %arg0 : i32, i32
  }
  func.func @transform_2(%arg0: i32) -> (i32, i32) {
    %c0_i32 = arith.constant 0 : i32
    %c0_i32_0 = arith.constant 0 : i32
    %c0_i32_1 = arith.constant 0 : i32
    return %c0_i32, %c0_i32_0 : i32, i32
  }
  func.func @transform_3(%arg0: i32) -> (i32, i32) {
    %c0_i32 = arith.constant 0 : i32
    %c0_i32_0 = arith.constant 0 : i32
    %c0_i32_1 = arith.constant 0 : i32
    return %c0_i32, %c0_i32_0 : i32, i32
  }
  func.func @transform_4(%arg0: i32) -> (i32, i32) {
    %c0_i32 = arith.constant 0 : i32
    %c0_i32_0 = arith.constant 0 : i32
    %c0_i32_1 = arith.constant 0 : i32
    return %c0_i32, %c0_i32_0 : i32, i32
  }
  func.func @transform_5(%arg0: i32) -> (i32, i32) {
    %c0_i32 = arith.constant 0 : i32
    %c0_i32_0 = arith.constant 0 : i32
    %c0_i32_1 = arith.constant 0 : i32
    return %c0_i32, %c0_i32_0 : i32, i32
  }
  func.func @transform_6(%arg0: i32) -> (i32, i32) {
    %c0_i32 = arith.constant 0 : i32
    %c0_i32_0 = arith.constant 0 : i32
    %c0_i32_1 = arith.constant 0 : i32
    return %c0_i32, %c0_i32_0 : i32, i32
  }
  func.func @transform_7(%arg0: i32) -> (i32, i32) {
    %c0_i32 = arith.constant 0 : i32
    %c0_i32_0 = arith.constant 0 : i32
    %c0_i32_1 = arith.constant 0 : i32
    return %c0_i32, %c0_i32_0 : i32, i32
  }
  func.func @transform_8(%arg0: i32) -> (i32, i32) {
    %c0_i32 = arith.constant 0 : i32
    %c0_i32_0 = arith.constant 0 : i32
    return %c0_i32, %arg0 : i32, i32
  }
}

</mosaic_0001>

<llo_original>
// kernel: tpu_custom_call.1
$region0: #{tpu_custom_call.1}
  #allocation0 [shape = 'u32[]', space=smem, size = 0x4, offset = 0x4, fixed_abs, tag = 'smem constant byte address 0x4 - core index']
  #allocation1 [shape = 'u32[144,128]{1,0:T(1,128)}', space=vmem, size = 0x12000, scoped, tag = 'internal scratch']
  %s0 = inlined_call_operand.vmem [shape: f32[8,4], index: 0, kind: input, shape index: {}]
  %s1 = inlined_call_operand.vmem [shape: f32[4,4], index: 1, kind: input, shape index: {}]
  %s2 = inlined_call_operand.vmem [shape: f32[32,8], index: 2, kind: input, shape index: {}]
  %s3 = inlined_call_operand.vmem [shape: f32[32,1], index: 3, kind: input, shape index: {}]
  %s4 = inlined_call_operand.vmem [shape: f32[32,32], index: 4, kind: input, shape index: {}]
  %s5 = inlined_call_operand.vmem [shape: f32[32,1], index: 5, kind: input, shape index: {}]
  %s6 = inlined_call_operand.vmem [shape: f32[8,32], index: 6, kind: input, shape index: {}]
  %s7 = inlined_call_operand.vmem [shape: f32[8,1], index: 7, kind: input, shape index: {}]
  %s8 = inlined_call_operand.vmem [shape: f32[5,4], index: 8, kind: output, shape index: {}]
  %s9 = sld [smem:[#allocation0]]
  $region42: #{tpu_custom_call.1} parent=0
    _
  %s11 = ssub.s32 1, %s9
  %s12 = scalar_select 0, %s11, %s9
  // Predicated region
  $region2: #{tpu_custom_call.1} parent=0 // pred_check
    _
  $region3: #{tpu_custom_call.1} parent=0 // pred_check_branch
    %14 = sbr.rel (0) target = $region5
  $region4: #{tpu_custom_call.1} parent=0 // pred_region
    _
  $region5: #{tpu_custom_call.1} parent=0 // pred_fallthru
    _
  // Predicated region
  $region6: #{tpu_custom_call.1} parent=0 // pred_check
    _
  $region7: #{tpu_custom_call.1} parent=0 // pred_check_branch
    %16 = sbr.rel (0) target = $region9
  $region8: #{tpu_custom_call.1} parent=0 // pred_region
    _
  $region9: #{tpu_custom_call.1} parent=0 // pred_fallthru
    _
  // Predicated region
  $region10: #{tpu_custom_call.1} parent=0 // pred_check
    _
  $region11: #{tpu_custom_call.1} parent=0 // pred_check_branch
    %18 = sbr.rel (0) target = $region13
  $region12: #{tpu_custom_call.1} parent=0 // pred_region
    _
  $region13: #{tpu_custom_call.1} parent=0 // pred_fallthru
    _
  // Predicated region
  $region14: #{tpu_custom_call.1} parent=0 // pred_check
    _
  $region15: #{tpu_custom_call.1} parent=0 // pred_check_branch
    %20 = sbr.rel (0) target = $region17
  $region16: #{tpu_custom_call.1} parent=0 // pred_region
    _
  $region17: #{tpu_custom_call.1} parent=0 // pred_fallthru
    _
  // Predicated region
  $region18: #{tpu_custom_call.1} parent=0 // pred_check
    _
  $region19: #{tpu_custom_call.1} parent=0 // pred_check_branch
    %22 = sbr.rel (0) target = $region21
  $region20: #{tpu_custom_call.1} parent=0 // pred_region
    _
  $region21: #{tpu_custom_call.1} parent=0 // pred_fallthru
    _
  // Predicated region
  $region22: #{tpu_custom_call.1} parent=0 // pred_check
    _
  $region23: #{tpu_custom_call.1} parent=0 // pred_check_branch
    %24 = sbr.rel (0) target = $region25
  $region24: #{tpu_custom_call.1} parent=0 // pred_region
    _
  $region25: #{tpu_custom_call.1} parent=0 // pred_fallthru
    _
  // Predicated region
  $region26: #{tpu_custom_call.1} parent=0 // pred_check
    _
  $region27: #{tpu_custom_call.1} parent=0 // pred_check_branch
    %26 = sbr.rel (0) target = $region29
  $region28: #{tpu_custom_call.1} parent=0 // pred_region
    _
  $region29: #{tpu_custom_call.1} parent=0 // pred_fallthru
    _
  // Predicated region
  $region30: #{tpu_custom_call.1} parent=0 // pred_check
    _
  $region31: #{tpu_custom_call.1} parent=0 // pred_check_branch
    %28 = sbr.rel (0) target = $region33
  $region32: #{tpu_custom_call.1} parent=0 // pred_region
    _
  $region33: #{tpu_custom_call.1} parent=0 // pred_fallthru
    _
  %v29 = vld [vmem:[%s0] sm:$0xff]
  %v30 = vld [vmem:[%s2] sm:$0xff]
  %v31 = vld [vmem:[%s2 + $0x8] sm:$0xff]
  %v32 = vld [vmem:[%s2 + $0x10] sm:$0xff]
  %v33 = vld [vmem:[%s2 + $0x18] sm:$0xff]
  %v34 = vld [vmem:[%s3] sm:$0xff]
  %v35 = vld [vmem:[%s3 + $0x8] sm:$0xff]
  %v36 = vld [vmem:[%s3 + $0x10] sm:$0xff]
  %v37 = vld [vmem:[%s3 + $0x18] sm:$0xff]
  %39 = vset.pattern.permute.xlu0 0
  %40 = vperm.xlu0 %39, %v34
  %v41 = vpop.permute.xlu0 %40
  %44 = vset.pattern.permute.xlu0 0
  %45 = vperm.xlu0 %44, %v35
  %v46 = vpop.permute.xlu0 %45
  %49 = vset.pattern.permute.xlu0 0
  %50 = vperm.xlu0 %49, %v36
  %v51 = vpop.permute.xlu0 %50
  %54 = vset.pattern.permute.xlu0 0
  %55 = vperm.xlu0 %54, %v37
  %v56 = vpop.permute.xlu0 %55
  %vm58 = vcmask 64512
  %v60 = vsel %vm58, %v30, 0
  %v63 = vsel %vm58, %v31, 0
  %v66 = vsel %vm58, %v32, 0
  %v69 = vsel %vm58, %v33, 0
  %71 = vmatprep.subr.mxu0 0.0
  %72 = vmatpush1.msra.mxu0 %v29
  %73 = vmatprep.subr.mxu0 0.0
  %74 = vmatpush1.msra.mxu0 0.0
  %75 = vmatprep.subr.mxu0 0.0
  %76 = vmatpush1.msra.mxu0 0.0
  %77 = vmatprep.subr.mxu0 0.0
  %78 = vmatpush1.msra.mxu0 0.0
  %79 = vmatprep.subr.mxu0 0.0
  %80 = vmatpush1.msra.mxu0 0.0
  %81 = vmatprep.subr.mxu0 0.0
  %82 = vmatpush1.msra.mxu0 0.0
  %83 = vmatprep.subr.mxu0 0.0
  %84 = vmatpush1.msra.mxu0 0.0
  %85 = vmatprep.subr.mxu0 0.0
  %86 = vmatpush1.msra.mxu0 0.0
  %87 = vmatprep.subr.mxu0 0.0
  %88 = vmatpush1.msra.mxu0 0.0
  %89 = vmatprep.subr.mxu0 0.0
  %90 = vmatpush1.msra.mxu0 0.0
  %91 = vmatprep.subr.mxu0 0.0
  %92 = vmatpush1.msra.mxu0 0.0
  %93 = vmatprep.subr.mxu0 0.0
  %94 = vmatpush1.msra.mxu0 0.0
  %95 = vmatprep.subr.mxu0 0.0
  %96 = vmatpush1.msra.mxu0 0.0
  %97 = vmatprep.subr.mxu0 0.0
  %98 = vmatpush1.msra.mxu0 0.0
  %99 = vmatprep.subr.mxu0 0.0
  %100 = vmatpush1.msra.mxu0 0.0
  %101 = vmatprep.subr.mxu0 0.0
  %102 = vmatpush1.msra.mxu0 0.0
  %103 = vmatprep.subr.mxu0 0.0
  %104 = vmatpush1.msra.mxu0 0.0
  %105 = vmatprep.subr.mxu0 0.0
  %106 = vmatpush1.msra.mxu0 0.0
  %107 = vmatprep.subr.mxu0 0.0
  %108 = vmatpush1.msra.mxu0 0.0
  %109 = vmatprep.subr.mxu0 0.0
  %110 = vmatpush1.msra.mxu0 0.0
  %111 = vmatprep.subr.mxu0 0.0
  %112 = vmatpush1.msra.mxu0 0.0
  %113 = vmatprep.subr.mxu0 0.0
  %114 = vmatpush1.msra.mxu0 0.0
  %115 = vmatprep.subr.mxu0 0.0
  %116 = vmatpush1.msra.mxu0 0.0
  %117 = vmatprep.subr.mxu0 0.0
  %118 = vmatpush1.msra.mxu0 0.0
  %119 = vmatprep.subr.mxu0 0.0
  %120 = vmatpush1.msra.mxu0 0.0
  %121 = vmatprep.subr.mxu0 0.0
  %122 = vmatpush1.msra.mxu0 0.0
  %123 = vmatprep.subr.mxu0 0.0
  %124 = vmatpush1.msra.mxu0 0.0
  %125 = vmatprep.subr.mxu0 0.0
  %126 = vmatpush1.msra.mxu0 0.0
  %127 = vmatprep.subr.mxu0 0.0
  %128 = vmatpush1.msra.mxu0 0.0
  %129 = vmatprep.subr.mxu0 0.0
  %130 = vmatpush1.msra.mxu0 0.0
  %131 = vmatprep.subr.mxu0 0.0
  %132 = vmatpush1.msra.mxu0 0.0
  %133 = vmatprep.subr.mxu0 0.0
  %134 = vmatpush1.msra.mxu0 0.0
  %135 = vmatprep.mubr.f32.mxu0 0.0
  %136 = vmatmul.mubr.f32.gmra.mrb[0].mxu0 %v60
  %v137 = vpop.f32.mrb[0].mxu0
  %v138 = vadd.f32 %v41, %v137
  %v139 = vpop.f32.mrb[0].mxu0
  %140 = vmatprep.mubr.f32.mxu0 0.0
  %141 = vmatmul.mubr.f32.gmra.mrb[0].mxu0 %v63
  %v142 = vpop.f32.mrb[0].mxu0
  %v143 = vadd.f32 %v46, %v142
  %v144 = vpop.f32.mrb[0].mxu0
  %145 = vmatprep.mubr.f32.mxu0 0.0
  %146 = vmatmul.mubr.f32.gmra.mrb[0].mxu0 %v66
  %v147 = vpop.f32.mrb[0].mxu0
  %v148 = vadd.f32 %v51, %v147
  %v149 = vpop.f32.mrb[0].mxu0
  %150 = vmatprep.mubr.f32.mxu0 0.0
  %151 = vmatmul.mubr.f32.gmra.mrb[0].mxu0 %v69
  %v152 = vpop.f32.mrb[0].mxu0
  %v153 = vadd.f32 %v56, %v152
  %v154 = vpop.f32.mrb[0].mxu0
  %155 = vdwg.mxu0
  %v156 = vmax.f32 %v138, 0.0
  %v157 = vmax.f32 %v143, 0.0
  %v158 = vmax.f32 %v148, 0.0
  %v159 = vmax.f32 %v153, 0.0
  %v160 = vld [vmem:[%s4] sm:$0xff]
  %v161 = vld [vmem:[%s4 + $0x8] sm:$0xff]
  %v162 = vld [vmem:[%s4 + $0x10] sm:$0xff]
  %v163 = vld [vmem:[%s4 + $0x18] sm:$0xff]
  %v164 = vld [vmem:[%s5] sm:$0xff]
  %v165 = vld [vmem:[%s5 + $0x8] sm:$0xff]
  %v166 = vld [vmem:[%s5 + $0x10] sm:$0xff]
  %v167 = vld [vmem:[%s5 + $0x18] sm:$0xff]
  %169 = vset.pattern.permute.xlu0 0
  %170 = vperm.xlu0 %169, %v164
  %v171 = vpop.permute.xlu0 %170
  %174 = vset.pattern.permute.xlu0 0
  %175 = vperm.xlu0 %174, %v165
  %v176 = vpop.permute.xlu0 %175
  %179 = vset.pattern.permute.xlu0 0
  %180 = vperm.xlu0 %179, %v166
  %v181 = vpop.permute.xlu0 %180
  %184 = vset.pattern.permute.xlu0 0
  %185 = vperm.xlu0 %184, %v167
  %v186 = vpop.permute.xlu0 %185
  %vm188 = vcmask 261120
  %v190 = vsel %vm188, %v160, 0
  %v193 = vsel %vm188, %v161, 0
  %v196 = vsel %vm188, %v162, 0
  %v199 = vsel %vm188, %v163, 0
  %201 = vmatprep.subr.mxu0 0.0
  %202 = vmatpush1.msra.mxu0 %v156
  %203 = vmatprep.subr.mxu0 0.0
  %204 = vmatpush1.msra.mxu0 %v157
  %205 = vmatprep.subr.mxu0 0.0
  %206 = vmatpush1.msra.mxu0 %v158
  %207 = vmatprep.subr.mxu0 0.0
  %208 = vmatpush1.msra.mxu0 %v159
  %209 = vmatprep.subr.mxu0 0.0
  %210 = vmatpush1.msra.mxu0 0.0
  %211 = vmatprep.subr.mxu0 0.0
  %212 = vmatpush1.msra.mxu0 0.0
  %213 = vmatprep.subr.mxu0 0.0
  %214 = vmatpush1.msra.mxu0 0.0
  %215 = vmatprep.subr.mxu0 0.0
  %216 = vmatpush1.msra.mxu0 0.0
  %217 = vmatprep.subr.mxu0 0.0
  %218 = vmatpush1.msra.mxu0 0.0
  %219 = vmatprep.subr.mxu0 0.0
  %220 = vmatpush1.msra.mxu0 0.0
  %221 = vmatprep.subr.mxu0 0.0
  %222 = vmatpush1.msra.mxu0 0.0
  %223 = vmatprep.subr.mxu0 0.0
  %224 = vmatpush1.msra.mxu0 0.0
  %225 = vmatprep.subr.mxu0 0.0
  %226 = vmatpush1.msra.mxu0 0.0
  %227 = vmatprep.subr.mxu0 0.0
  %228 = vmatpush1.msra.mxu0 0.0
  %229 = vmatprep.subr.mxu0 0.0
  %230 = vmatpush1.msra.mxu0 0.0
  %231 = vmatprep.subr.mxu0 0.0
  %232 = vmatpush1.msra.mxu0 0.0
  %233 = vmatprep.subr.mxu0 0.0
  %234 = vmatpush1.msra.mxu0 0.0
  %235 = vmatprep.subr.mxu0 0.0
  %236 = vmatpush1.msra.mxu0 0.0
  %237 = vmatprep.subr.mxu0 0.0
  %238 = vmatpush1.msra.mxu0 0.0
  %239 = vmatprep.subr.mxu0 0.0
  %240 = vmatpush1.msra.mxu0 0.0
  %241 = vmatprep.subr.mxu0 0.0
  %242 = vmatpush1.msra.mxu0 0.0
  %243 = vmatprep.subr.mxu0 0.0
  %244 = vmatpush1.msra.mxu0 0.0
  %245 = vmatprep.subr.mxu0 0.0
  %246 = vmatpush1.msra.mxu0 0.0
  %247 = vmatprep.subr.mxu0 0.0
  %248 = vmatpush1.msra.mxu0 0.0
  %249 = vmatprep.subr.mxu0 0.0
  %250 = vmatpush1.msra.mxu0 0.0
  %251 = vmatprep.subr.mxu0 0.0
  %252 = vmatpush1.msra.mxu0 0.0
  %253 = vmatprep.subr.mxu0 0.0
  %254 = vmatpush1.msra.mxu0 0.0
  %255 = vmatprep.subr.mxu0 0.0
  %256 = vmatpush1.msra.mxu0 0.0
  %257 = vmatprep.subr.mxu0 0.0
  %258 = vmatpush1.msra.mxu0 0.0
  %259 = vmatprep.subr.mxu0 0.0
  %260 = vmatpush1.msra.mxu0 0.0
  %261 = vmatprep.subr.mxu0 0.0
  %262 = vmatpush1.msra.mxu0 0.0
  %263 = vmatprep.subr.mxu0 0.0
  %264 = vmatpush1.msra.mxu0 0.0
  %265 = vmatprep.mubr.f32.mxu0 0.0
  %266 = vmatmul.mubr.f32.gmra.mrb[0].mxu0 %v190
  %v267 = vpop.f32.mrb[0].mxu0
  %v268 = vadd.f32 %v171, %v267
  %v269 = vpop.f32.mrb[0].mxu0
  %270 = vmatprep.mubr.f32.mxu0 0.0
  %271 = vmatmul.mubr.f32.gmra.mrb[0].mxu0 %v193
  %v272 = vpop.f32.mrb[0].mxu0
  %v273 = vadd.f32 %v176, %v272
  %v274 = vpop.f32.mrb[0].mxu0
  %275 = vmatprep.mubr.f32.mxu0 0.0
  %276 = vmatmul.mubr.f32.gmra.mrb[0].mxu0 %v196
  %v277 = vpop.f32.mrb[0].mxu0
  %v278 = vadd.f32 %v181, %v277
  %v279 = vpop.f32.mrb[0].mxu0
  %280 = vmatprep.mubr.f32.mxu0 0.0
  %281 = vmatmul.mubr.f32.gmra.mrb[0].mxu0 %v199
  %v282 = vpop.f32.mrb[0].mxu0
  %v283 = vadd.f32 %v186, %v282
  %v284 = vpop.f32.mrb[0].mxu0
  %285 = vdwg.mxu0
  %v286 = vmax.f32 %v268, 0.0
  %v287 = vmax.f32 %v273, 0.0
  %v288 = vmax.f32 %v278, 0.0
  %v289 = vmax.f32 %v283, 0.0
  %v290 = vld [vmem:[%s6] sm:$0xff]
  %v291 = vld [vmem:[%s7] sm:$0xff]
  %293 = vset.pattern.permute.xlu0 0
  %294 = vperm.xlu0 %293, %v291
  %v295 = vpop.permute.xlu0 %294
  %v298 = vsel %vm188, %v290, 0
  %300 = vmatprep.subr.mxu0 0.0
  %301 = vmatpush1.msra.mxu0 %v286
  %302 = vmatprep.subr.mxu0 0.0
  %303 = vmatpush1.msra.mxu0 %v287
  %304 = vmatprep.subr.mxu0 0.0
  %305 = vmatpush1.msra.mxu0 %v288
  %306 = vmatprep.subr.mxu0 0.0
  %307 = vmatpush1.msra.mxu0 %v289
  %308 = vmatprep.subr.mxu0 0.0
  %309 = vmatpush1.msra.mxu0 0.0
  %310 = vmatprep.subr.mxu0 0.0
  %311 = vmatpush1.msra.mxu0 0.0
  %312 = vmatprep.subr.mxu0 0.0
  %313 = vmatpush1.msra.mxu0 0.0
  %314 = vmatprep.subr.mxu0 0.0
  %315 = vmatpush1.msra.mxu0 0.0
  %316 = vmatprep.subr.mxu0 0.0
  %317 = vmatpush1.msra.mxu0 0.0
  %318 = vmatprep.subr.mxu0 0.0
  %319 = vmatpush1.msra.mxu0 0.0
  %320 = vmatprep.subr.mxu0 0.0
  %321 = vmatpush1.msra.mxu0 0.0
  %322 = vmatprep.subr.mxu0 0.0
  %323 = vmatpush1.msra.mxu0 0.0
  %324 = vmatprep.subr.mxu0 0.0
  %325 = vmatpush1.msra.mxu0 0.0
  %326 = vmatprep.subr.mxu0 0.0
  %327 = vmatpush1.msra.mxu0 0.0
  %328 = vmatprep.subr.mxu0 0.0
  %329 = vmatpush1.msra.mxu0 0.0
  %330 = vmatprep.subr.mxu0 0.0
  %331 = vmatpush1.msra.mxu0 0.0
  %332 = vmatprep.subr.mxu0 0.0
  %333 = vmatpush1.msra.mxu0 0.0
  %334 = vmatprep.subr.mxu0 0.0
  %335 = vmatpush1.msra.mxu0 0.0
  %336 = vmatprep.subr.mxu0 0.0
  %337 = vmatpush1.msra.mxu0 0.0
  %338 = vmatprep.subr.mxu0 0.0
  %339 = vmatpush1.msra.mxu0 0.0
  %340 = vmatprep.subr.mxu0 0.0
  %341 = vmatpush1.msra.mxu0 0.0
  %342 = vmatprep.subr.mxu0 0.0
  %343 = vmatpush1.msra.mxu0 0.0
  %344 = vmatprep.subr.mxu0 0.0
  %345 = vmatpush1.msra.mxu0 0.0
  %346 = vmatprep.subr.mxu0 0.0
  %347 = vmatpush1.msra.mxu0 0.0
  %348 = vmatprep.subr.mxu0 0.0
  %349 = vmatpush1.msra.mxu0 0.0
  %350 = vmatprep.subr.mxu0 0.0
  %351 = vmatpush1.msra.mxu0 0.0
  %352 = vmatprep.subr.mxu0 0.0
  %353 = vmatpush1.msra.mxu0 0.0
  %354 = vmatprep.subr.mxu0 0.0
  %355 = vmatpush1.msra.mxu0 0.0
  %356 = vmatprep.subr.mxu0 0.0
  %357 = vmatpush1.msra.mxu0 0.0
  %358 = vmatprep.subr.mxu0 0.0
  %359 = vmatpush1.msra.mxu0 0.0
  %360 = vmatprep.subr.mxu0 0.0
  %361 = vmatpush1.msra.mxu0 0.0
  %362 = vmatprep.subr.mxu0 0.0
  %363 = vmatpush1.msra.mxu0 0.0
  %364 = vmatprep.mubr.f32.mxu0 0.0
  %365 = vmatmul.mubr.f32.gmra.mrb[0].mxu0 %v298
  %v366 = vpop.f32.mrb[0].mxu0
  %v367 = vadd.f32 %v295, %v366
  %v368 = vpop.f32.mrb[0].mxu0
  %369 = vdwg.mxu0
  %v370 = vmax.f32 %v367, -20.0
  %v371 = vmin.f32 %v370, 2.0
  %v372 = vld [vmem:[%s1] sm:$0xf]
  %v373 = vmul.f32 %v371, 1.442695
  %v374 = vpow.pop %v373
  %v376 = vrot.slane %v372, 4
  %v378 = vmul.f32 %v374, %v376
  %v380 = vrot.slane %v378, 4
  %v382 = vadd.f32 %v367, %v380
  %v383 = vtanh.pop %v382
  %v384 = vmul.f32 %v372, -0.5
  %v385 = vmul.f32 %v384, %v372
  %v387 = vrot.slane %v371, 4
  %v389 = vsub.f32 %v385, %v387
  %v390 = vsub.f32 %v389, 0.9189385
  %v391 = vsub.f32 0.6931472, %v382
  %v392 = vmul.f32 %v382, -2.0
  %v393 = vmax.f32 %v392, 0.0
  %v394 = vand.u32 2147483647, %v392
  %v395 = vsub.f32 0.0, %v394
  %v396 = vmul.f32 %v395, 1.442695
  %v397 = vpow.pop %v396
  %v398 = vadd.f32 %v397, 1.0
  %v399 = vlog2.pop %v398
  %v400 = vmul.f32 %v399, 0.6931472
  %v401 = vmul.f32 -0.5, %v397
  %v402 = vadd.f32 %v401, 1.0
  %v403 = vmul.f32 %v402, %v397
  %v404 = vand.u32 2147483647, %v397
  %vm405 = vcmp.lt.f32.partialorder %v404, 0.0004427343
  %v406 = vsel %vm405, %v403, %v400
  %v407 = vadd.f32 %v393, %v406
  %v408 = vsub.f32 %v391, %v407
  %v409 = vmul.f32 %v408, 2.0
  %v410 = vsub.f32 %v390, %v409
  %vm411 = vcmask 27648
  %v412 = vsel %vm411, %v410, 0.0
  %v413 = vrot.slane %v412, 4
  %v414 = vadd.f32 %v412, %v413
  %v415 = vrot.slane %v414, 2
  %v416 = vadd.f32 %v414, %v415
  %v417 = vrot.slane %v416, 1
  %v418 = vadd.f32 %v416, %v417
  %419 = vst.msk [vmem:[%s8] sm:$0xf] %vm411, %v383
  %vm420 = vcmask 24576
  %421 = vst.msk [vmem:[%s8 + $0x4] sm:$0x1] %vm420, %v418
  // Predicated region
  $region34: #{tpu_custom_call.1} parent=0 // pred_check
    _
  $region35: #{tpu_custom_call.1} parent=0 // pred_check_branch
    %423 = sbr.rel (0) target = $region37
  $region36: #{tpu_custom_call.1} parent=0 // pred_region
    _
  $region37: #{tpu_custom_call.1} parent=0 // pred_fallthru
    _
  // Predicated region
  $region38: #{tpu_custom_call.1} parent=0 // pred_check
    _
  $region39: #{tpu_custom_call.1} parent=0 // pred_check_branch
    %425 = sbr.rel (0) target = $region41
  $region40: #{tpu_custom_call.1} parent=0 // pred_region
    _
  $region41: #{tpu_custom_call.1} parent=0 // pred_fallthru
    _

</llo_original>
